<compile_context>
chip_gen: v7x
topology: tpu7x:2x2x1
jax: 0.10.0
libtpu: 0.0.40
codegen_flags: <defaults>
</compile_context>

<pallas_src>
import functools

import jax
import jax.numpy as jnp
from jax.experimental import pallas as pl


# -----------------------------------------------------------------------------
# Fused Pallas kernel: both siamese branches folded into the batch dimension
# -----------------------------------------------------------------------------
def _siamese_gru_kernel(x_ref, h0_ref, wih_ref, whh_ref, bgx_ref, bhn_ref,
                        w23_ref, b23_ref, logits_ref, hout_ref, *, T, H):
    """GRU over time + fused fc2·fc3 head for both branches at once.

    x_ref:    (T*2N, I)  time-major inputs, bf16 (rows t*2N..t*2N+2N-1 = step t)
    h0_ref:   (2N, H)    initial hidden state (branch1 rows, then branch2), f32
    wih_ref:  (I, 3H)    packed [r|z|n] input weights,  bf16
    whh_ref:  (H, 3H)    packed [r|z|n] hidden weights, bf16
    bgx_ref:  (1, 3H)    [b_ir+b_hr | b_iz+b_hz | b_in], f32
    bhn_ref:  (1, H)     b_hn (stays per-step: gated by r), f32
    w23_ref:  (H, H)     fused head weight  wfc2 @ wfc3, bf16
    b23_ref:  (1, H)     fused head bias    bfc2 @ wfc3 + bfc3, f32
    logits_ref: (2N, H)  head output
    hout_ref:   (2N, H)  final hidden state h_T
    """
    NB = h0_ref.shape[0]

    # Input-to-gate transform for all timesteps and both branches: one matmul.
    gx_all = jnp.dot(x_ref[...], wih_ref[...],
                     preferred_element_type=jnp.float32) + bgx_ref[...]

    whh = whh_ref[...]
    bhn = bhn_ref[...]
    h = h0_ref[...]
    # Static unrolled time loop (true sequential dependency; T is small).
    for t in range(T):
        gh = jnp.dot(h.astype(jnp.bfloat16), whh,
                     preferred_element_type=jnp.float32)
        gx = gx_all[t * NB:(t + 1) * NB, :]          # contiguous static slice
        r = jax.nn.sigmoid(gx[:, 0:H] + gh[:, 0:H])
        z = jax.nn.sigmoid(gx[:, H:2 * H] + gh[:, H:2 * H])
        n = jnp.tanh(gx[:, 2 * H:3 * H] + r * (gh[:, 2 * H:3 * H] + bhn))
        h = (1.0 - z) * n + z * h

    hout_ref[...] = h
    # Fused head: fc3(dropout(fc2(h_T))) == h_T @ (wfc2 @ wfc3) + b23 at inference.
    logits_ref[...] = jnp.dot(h.astype(jnp.bfloat16), w23_ref[...],
                              preferred_element_type=jnp.float32) + b23_ref[...]


# -----------------------------------------------------------------------------
# Wrapper: SiameseGRUNet.forward(input1, input2, hidden)
# -----------------------------------------------------------------------------
def siamese_forward(params, input1, input2, hidden):
    """input1/input2: (N, T, I); hidden: (n_layers*n_dirs, N, H) = (1, N, H).

    Returns (output1, output2, h1, h2) like the PyTorch module.
    """
    N, T, I = input1.shape
    H = params["whh"].shape[0]
    H3 = 3 * H
    NB = 2 * N

    # Fold branches into batch: rows 0..N-1 -> branch 1, N..2N-1 -> branch 2.
    xb = jnp.concatenate([input1, input2], axis=0)               # (2N, T, I)
    # Time-major + flattened so step t's gate slab is rows [t*2N, (t+1)*2N).
    x_tm = jnp.transpose(xb, (1, 0, 2)).reshape(T * NB, I).astype(jnp.bfloat16)
    h0 = jnp.concatenate([hidden[0], hidden[0]], axis=0).astype(jnp.float32)

    bih, bhh = params["bih"], params["bhh"]
    # r/z biases fold into the one-shot gx; b_hn stays per-step (gated by r).
    bgx = jnp.concatenate([bih[:2 * H] + bhh[:2 * H],
                           bih[2 * H:]]).reshape(1, H3).astype(jnp.float32)
    bhn = bhh[2 * H:].reshape(1, H).astype(jnp.float32)

    # Fused inference head (dropout is identity; no nonlinearity between fc2/fc3).
    w23 = (params["wfc2"] @ params["wfc3"]).astype(jnp.bfloat16)
    b23 = (params["bfc2"] @ params["wfc3"]
           + params["bfc3"]).reshape(1, H).astype(jnp.float32)

    kernel = functools.partial(_siamese_gru_kernel, T=T, H=H)
    logits, hout = pl.pallas_call(
        kernel,
        out_shape=(jax.ShapeDtypeStruct((NB, H), jnp.float32),
                   jax.ShapeDtypeStruct((NB, H), jnp.float32)),
    )(x_tm, h0,
      params["wih"].astype(jnp.bfloat16), params["whh"].astype(jnp.bfloat16),
      bgx, bhn, w23, b23)

    out1, out2 = logits[:N], logits[N:]
    h1, h2 = hout[:N][None], hout[N:][None]     # back to (1, N, H) like PyTorch
    return out1, out2, h1, h2


def init_hidden(batch_size, hidden_size, n_layers=1, n_directions=1):
    return jnp.zeros((n_layers * n_directions, batch_size, hidden_size),
                     jnp.float32)


# -----------------------------------------------------------------------------
# Parameters (deterministic synthetic init, stored pre-transposed for matmuls)
# -----------------------------------------------------------------------------
def init_params(key, input_size, hidden_size):
    ks = jax.random.split(key, 8)
    s = 0.1
    H = hidden_size
    return {
        "wih": s * jax.random.normal(ks[0], (input_size, 3 * H), jnp.float32),
        "whh": s * jax.random.normal(ks[1], (H, 3 * H), jnp.float32),
        "bih": s * jax.random.normal(ks[2], (3 * H,), jnp.float32),
        "bhh": s * jax.random.normal(ks[3], (3 * H,), jnp.float32),
        "wfc2": s * jax.random.normal(ks[4], (H, H), jnp.float32),
        "bfc2": s * jax.random.normal(ks[5], (H,), jnp.float32),
        "wfc3": s * jax.random.normal(ks[6], (H, H), jnp.float32),
        "bfc3": s * jax.random.normal(ks[7], (H,), jnp.float32),
    }


# -----------------------------------------------------------------------------
# Pure-JAX f32 reference (mirrors PyTorch GRU math) for a correctness check
# -----------------------------------------------------------------------------
def _ref_branch(params, x, h0):
    H = params["whh"].shape[0]

    def step(h, xt):
        gx = xt @ params["wih"] + params["bih"]
        gh = h @ params["whh"] + params["bhh"]
        r = jax.nn.sigmoid(gx[:, :H] + gh[:, :H])
        z = jax.nn.sigmoid(gx[:, H:2 * H] + gh[:, H:2 * H])
        n = jnp.tanh(gx[:, 2 * H:] + r * gh[:, 2 * H:])
        return (1.0 - z) * n + z * h, None

    hT, _ = jax.lax.scan(step, h0, jnp.swapaxes(x, 0, 1))
    logits = (hT @ params["wfc2"] + params["bfc2"]) @ params["wfc3"] + params["bfc3"]
    return logits, hT


def _ref_siamese(params, input1, input2, hidden):
    o1, h1 = _ref_branch(params, input1, hidden[0])
    o2, h2 = _ref_branch(params, input2, hidden[0])
    return o1, o2, h1[None], h2[None]


# -----------------------------------------------------------------------------
if __name__ == "__main__":
    input_size = 16
    hidden_size = 32
    N, T = 2, 8           # batch, sequence length

    root = jax.random.PRNGKey(0)
    k_p, k_x1, k_x2, k_h = jax.random.split(root, 4)
    params = init_params(k_p, input_size, hidden_size)

    input1 = jax.random.normal(k_x1, (N, T, input_size), jnp.float32)
    input2 = jax.random.normal(k_x2, (N, T, input_size), jnp.float32)
    # Same initial hidden fed to both branches (as in SiameseGRUNet.forward).
    hidden = 0.1 * jax.random.normal(k_h, (1, N, hidden_size), jnp.float32)

    out1, out2, h1, h2 = siamese_forward(params, input1, input2, hidden)
    out1, out2, h1, h2 = jax.block_until_ready((out1, out2, h1, h2))

    assert out1.shape == (N, hidden_size) and out2.shape == (N, hidden_size)
    assert h1.shape == (1, N, hidden_size) and h2.shape == (1, N, hidden_size)

    # Kernel uses bf16 matmul operands with f32 accumulation, so compare
    # against the pure-f32 reference with a bf16-appropriate tolerance.
    r1, r2, rh1, rh2 = _ref_siamese(params, input1, input2, hidden)
    assert jnp.allclose(out1, r1, atol=1e-2, rtol=1e-2)
    assert jnp.allclose(out2, r2, atol=1e-2, rtol=1e-2)
    assert jnp.allclose(h1, rh1, atol=1e-2, rtol=1e-2)
    assert jnp.allclose(h2, rh2, atol=1e-2, rtol=1e-2)

    print("KERNEL_OK")
</pallas_src>

<mosaic_0001>
module attributes {stable_mosaic.version = 11 : i64} {
  func.func @_siamese_gru_kernel(%arg0: memref<32x16xbf16, #tpu.memory_space<vmem>>, %arg1: memref<4x32xf32, #tpu.memory_space<vmem>>, %arg2: memref<16x96xbf16, #tpu.memory_space<vmem>>, %arg3: memref<32x96xbf16, #tpu.memory_space<vmem>>, %arg4: memref<1x96xf32, #tpu.memory_space<vmem>>, %arg5: memref<1x32xf32, #tpu.memory_space<vmem>>, %arg6: memref<32x32xbf16, #tpu.memory_space<vmem>>, %arg7: memref<1x32xf32, #tpu.memory_space<vmem>>, %arg8: memref<4x32xf32, #tpu.memory_space<vmem>>, %arg9: memref<4x32xf32, #tpu.memory_space<vmem>>) attributes {dimension_semantics = [], scalar_prefetch = 0 : i64, scratch_operands = 0 : i64, tpu.core_type = #tpu.core_type<tc>} {
    %c0 = arith.constant 0 : index
    %c0_0 = arith.constant 0 : index
    %0 = vector.load %arg0[%c0, %c0_0] : memref<32x16xbf16, #tpu.memory_space<vmem>>, vector<32x16xbf16>
    %c0_1 = arith.constant 0 : index
    %c0_2 = arith.constant 0 : index
    %1 = vector.load %arg2[%c0_1, %c0_2] : memref<16x96xbf16, #tpu.memory_space<vmem>>, vector<16x96xbf16>
    %cst = arith.constant dense<0.000000e+00> : vector<32x96xf32>
    %2 = tpu.matmul %0, %1, %cst {dimension_numbers = #tpu.dot_dimension_numbers<[1], [0], [0], [1], [0, 0, 1, 1], [], []>} : vector<32x16xbf16>, vector<16x96xbf16>, vector<32x96xf32> -> vector<32x96xf32>
    %c0_3 = arith.constant 0 : index
    %c0_4 = arith.constant 0 : index
    %3 = vector.load %arg4[%c0_3, %c0_4] : memref<1x96xf32, #tpu.memory_space<vmem>>, vector<1x96xf32>
    %4 = vector.broadcast %3 : vector<1x96xf32> to vector<32x96xf32>
    %5 = arith.addf %2, %4 : vector<32x96xf32>
    %c0_5 = arith.constant 0 : index
    %c0_6 = arith.constant 0 : index
    %6 = vector.load %arg3[%c0_5, %c0_6] : memref<32x96xbf16, #tpu.memory_space<vmem>>, vector<32x96xbf16>
    %c0_7 = arith.constant 0 : index
    %c0_8 = arith.constant 0 : index
    %7 = vector.load %arg5[%c0_7, %c0_8] : memref<1x32xf32, #tpu.memory_space<vmem>>, vector<1x32xf32>
    %c0_9 = arith.constant 0 : index
    %c0_10 = arith.constant 0 : index
    %8 = vector.load %arg1[%c0_9, %c0_10] : memref<4x32xf32, #tpu.memory_space<vmem>>, vector<4x32xf32>
    %9 = arith.truncf %8 : vector<4x32xf32> to vector<4x32xbf16>
    %cst_11 = arith.constant dense<0.000000e+00> : vector<4x96xf32>
    %10 = tpu.matmul %9, %6, %cst_11 {dimension_numbers = #tpu.dot_dimension_numbers<[1], [0], [0], [1], [0, 0, 1, 1], [], []>} : vector<4x32xbf16>, vector<32x96xbf16>, vector<4x96xf32> -> vector<4x96xf32>
    %11 = vector.extract_strided_slice %5 {offsets = [0, 0], sizes = [4, 96], strides = [1, 1]} : vector<32x96xf32> to vector<4x96xf32>
    %12 = vector.extract_strided_slice %11 {offsets = [0, 0], sizes = [4, 32], strides = [1, 1]} : vector<4x96xf32> to vector<4x32xf32>
    %13 = vector.extract_strided_slice %10 {offsets = [0, 0], sizes = [4, 32], strides = [1, 1]} : vector<4x96xf32> to vector<4x32xf32>
    %14 = arith.addf %12, %13 : vector<4x32xf32>
    %15 = arith.negf %14 : vector<4x32xf32>
    %16 = math.exp %15 : vector<4x32xf32>
    %cst_12 = arith.constant 1.000000e+00 : f32
    %17 = vector.broadcast %cst_12 : f32 to vector<4x32xf32>
    %18 = arith.addf %17, %16 : vector<4x32xf32>
    %19 = arith.divf %17, %18 : vector<4x32xf32>
    %20 = vector.extract_strided_slice %11 {offsets = [0, 32], sizes = [4, 32], strides = [1, 1]} : vector<4x96xf32> to vector<4x32xf32>
    %21 = vector.extract_strided_slice %10 {offsets = [0, 32], sizes = [4, 32], strides = [1, 1]} : vector<4x96xf32> to vector<4x32xf32>
    %22 = arith.addf %20, %21 : vector<4x32xf32>
    %23 = arith.negf %22 : vector<4x32xf32>
    %24 = math.exp %23 : vector<4x32xf32>
    %cst_13 = arith.constant 1.000000e+00 : f32
    %25 = vector.broadcast %cst_13 : f32 to vector<4x32xf32>
    %26 = arith.addf %25, %24 : vector<4x32xf32>
    %27 = arith.divf %25, %26 : vector<4x32xf32>
    %28 = vector.extract_strided_slice %11 {offsets = [0, 64], sizes = [4, 32], strides = [1, 1]} : vector<4x96xf32> to vector<4x32xf32>
    %29 = vector.extract_strided_slice %10 {offsets = [0, 64], sizes = [4, 32], strides = [1, 1]} : vector<4x96xf32> to vector<4x32xf32>
    %30 = vector.broadcast %7 : vector<1x32xf32> to vector<4x32xf32>
    %31 = arith.addf %29, %30 : vector<4x32xf32>
    %32 = arith.mulf %19, %31 : vector<4x32xf32>
    %33 = arith.addf %28, %32 : vector<4x32xf32>
    %34 = math.tanh %33 : vector<4x32xf32>
    %cst_14 = arith.constant 1.000000e+00 : f32
    %35 = vector.broadcast %cst_14 : f32 to vector<4x32xf32>
    %36 = arith.subf %35, %27 : vector<4x32xf32>
    %37 = arith.mulf %36, %34 : vector<4x32xf32>
    %38 = arith.mulf %27, %8 : vector<4x32xf32>
    %39 = arith.addf %37, %38 : vector<4x32xf32>
    %40 = arith.truncf %39 : vector<4x32xf32> to vector<4x32xbf16>
    %cst_15 = arith.constant dense<0.000000e+00> : vector<4x96xf32>
    %41 = tpu.matmul %40, %6, %cst_15 {dimension_numbers = #tpu.dot_dimension_numbers<[1], [0], [0], [1], [0, 0, 1, 1], [], []>} : vector<4x32xbf16>, vector<32x96xbf16>, vector<4x96xf32> -> vector<4x96xf32>
    %42 = vector.extract_strided_slice %5 {offsets = [4, 0], sizes = [4, 96], strides = [1, 1]} : vector<32x96xf32> to vector<4x96xf32>
    %43 = vector.extract_strided_slice %42 {offsets = [0, 0], sizes = [4, 32], strides = [1, 1]} : vector<4x96xf32> to vector<4x32xf32>
    %44 = vector.extract_strided_slice %41 {offsets = [0, 0], sizes = [4, 32], strides = [1, 1]} : vector<4x96xf32> to vector<4x32xf32>
    %45 = arith.addf %43, %44 : vector<4x32xf32>
    %46 = arith.negf %45 : vector<4x32xf32>
    %47 = math.exp %46 : vector<4x32xf32>
    %cst_16 = arith.constant 1.000000e+00 : f32
    %48 = vector.broadcast %cst_16 : f32 to vector<4x32xf32>
    %49 = arith.addf %48, %47 : vector<4x32xf32>
    %50 = arith.divf %48, %49 : vector<4x32xf32>
    %51 = vector.extract_strided_slice %42 {offsets = [0, 32], sizes = [4, 32], strides = [1, 1]} : vector<4x96xf32> to vector<4x32xf32>
    %52 = vector.extract_strided_slice %41 {offsets = [0, 32], sizes = [4, 32], strides = [1, 1]} : vector<4x96xf32> to vector<4x32xf32>
    %53 = arith.addf %51, %52 : vector<4x32xf32>
    %54 = arith.negf %53 : vector<4x32xf32>
    %55 = math.exp %54 : vector<4x32xf32>
    %cst_17 = arith.constant 1.000000e+00 : f32
    %56 = vector.broadcast %cst_17 : f32 to vector<4x32xf32>
    %57 = arith.addf %56, %55 : vector<4x32xf32>
    %58 = arith.divf %56, %57 : vector<4x32xf32>
    %59 = vector.extract_strided_slice %42 {offsets = [0, 64], sizes = [4, 32], strides = [1, 1]} : vector<4x96xf32> to vector<4x32xf32>
    %60 = vector.extract_strided_slice %41 {offsets = [0, 64], sizes = [4, 32], strides = [1, 1]} : vector<4x96xf32> to vector<4x32xf32>
    %61 = vector.broadcast %7 : vector<1x32xf32> to vector<4x32xf32>
    %62 = arith.addf %60, %61 : vector<4x32xf32>
    %63 = arith.mulf %50, %62 : vector<4x32xf32>
    %64 = arith.addf %59, %63 : vector<4x32xf32>
    %65 = math.tanh %64 : vector<4x32xf32>
    %cst_18 = arith.constant 1.000000e+00 : f32
    %66 = vector.broadcast %cst_18 : f32 to vector<4x32xf32>
    %67 = arith.subf %66, %58 : vector<4x32xf32>
    %68 = arith.mulf %67, %65 : vector<4x32xf32>
    %69 = arith.mulf %58, %39 : vector<4x32xf32>
    %70 = arith.addf %68, %69 : vector<4x32xf32>
    %71 = arith.truncf %70 : vector<4x32xf32> to vector<4x32xbf16>
    %cst_19 = arith.constant dense<0.000000e+00> : vector<4x96xf32>
    %72 = tpu.matmul %71, %6, %cst_19 {dimension_numbers = #tpu.dot_dimension_numbers<[1], [0], [0], [1], [0, 0, 1, 1], [], []>} : vector<4x32xbf16>, vector<32x96xbf16>, vector<4x96xf32> -> vector<4x96xf32>
    %73 = vector.extract_strided_slice %5 {offsets = [8, 0], sizes = [4, 96], strides = [1, 1]} : vector<32x96xf32> to vector<4x96xf32>
    %74 = vector.extract_strided_slice %73 {offsets = [0, 0], sizes = [4, 32], strides = [1, 1]} : vector<4x96xf32> to vector<4x32xf32>
    %75 = vector.extract_strided_slice %72 {offsets = [0, 0], sizes = [4, 32], strides = [1, 1]} : vector<4x96xf32> to vector<4x32xf32>
    %76 = arith.addf %74, %75 : vector<4x32xf32>
    %77 = arith.negf %76 : vector<4x32xf32>
    %78 = math.exp %77 : vector<4x32xf32>
    %cst_20 = arith.constant 1.000000e+00 : f32
    %79 = vector.broadcast %cst_20 : f32 to vector<4x32xf32>
    %80 = arith.addf %79, %78 : vector<4x32xf32>
    %81 = arith.divf %79, %80 : vector<4x32xf32>
    %82 = vector.extract_strided_slice %73 {offsets = [0, 32], sizes = [4, 32], strides = [1, 1]} : vector<4x96xf32> to vector<4x32xf32>
    %83 = vector.extract_strided_slice %72 {offsets = [0, 32], sizes = [4, 32], strides = [1, 1]} : vector<4x96xf32> to vector<4x32xf32>
    %84 = arith.addf %82, %83 : vector<4x32xf32>
    %85 = arith.negf %84 : vector<4x32xf32>
    %86 = math.exp %85 : vector<4x32xf32>
    %cst_21 = arith.constant 1.000000e+00 : f32
    %87 = vector.broadcast %cst_21 : f32 to vector<4x32xf32>
    %88 = arith.addf %87, %86 : vector<4x32xf32>
    %89 = arith.divf %87, %88 : vector<4x32xf32>
    %90 = vector.extract_strided_slice %73 {offsets = [0, 64], sizes = [4, 32], strides = [1, 1]} : vector<4x96xf32> to vector<4x32xf32>
    %91 = vector.extract_strided_slice %72 {offsets = [0, 64], sizes = [4, 32], strides = [1, 1]} : vector<4x96xf32> to vector<4x32xf32>
    %92 = vector.broadcast %7 : vector<1x32xf32> to vector<4x32xf32>
    %93 = arith.addf %91, %92 : vector<4x32xf32>
    %94 = arith.mulf %81, %93 : vector<4x32xf32>
    %95 = arith.addf %90, %94 : vector<4x32xf32>
    %96 = math.tanh %95 : vector<4x32xf32>
    %cst_22 = arith.constant 1.000000e+00 : f32
    %97 = vector.broadcast %cst_22 : f32 to vector<4x32xf32>
    %98 = arith.subf %97, %89 : vector<4x32xf32>
    %99 = arith.mulf %98, %96 : vector<4x32xf32>
    %100 = arith.mulf %89, %70 : vector<4x32xf32>
    %101 = arith.addf %99, %100 : vector<4x32xf32>
    %102 = arith.truncf %101 : vector<4x32xf32> to vector<4x32xbf16>
    %cst_23 = arith.constant dense<0.000000e+00> : vector<4x96xf32>
    %103 = tpu.matmul %102, %6, %cst_23 {dimension_numbers = #tpu.dot_dimension_numbers<[1], [0], [0], [1], [0, 0, 1, 1], [], []>} : vector<4x32xbf16>, vector<32x96xbf16>, vector<4x96xf32> -> vector<4x96xf32>
    %104 = vector.extract_strided_slice %5 {offsets = [12, 0], sizes = [4, 96], strides = [1, 1]} : vector<32x96xf32> to vector<4x96xf32>
    %105 = vector.extract_strided_slice %104 {offsets = [0, 0], sizes = [4, 32], strides = [1, 1]} : vector<4x96xf32> to vector<4x32xf32>
    %106 = vector.extract_strided_slice %103 {offsets = [0, 0], sizes = [4, 32], strides = [1, 1]} : vector<4x96xf32> to vector<4x32xf32>
    %107 = arith.addf %105, %106 : vector<4x32xf32>
    %108 = arith.negf %107 : vector<4x32xf32>
    %109 = math.exp %108 : vector<4x32xf32>
    %cst_24 = arith.constant 1.000000e+00 : f32
    %110 = vector.broadcast %cst_24 : f32 to vector<4x32xf32>
    %111 = arith.addf %110, %109 : vector<4x32xf32>
    %112 = arith.divf %110, %111 : vector<4x32xf32>
    %113 = vector.extract_strided_slice %104 {offsets = [0, 32], sizes = [4, 32], strides = [1, 1]} : vector<4x96xf32> to vector<4x32xf32>
    %114 = vector.extract_strided_slice %103 {offsets = [0, 32], sizes = [4, 32], strides = [1, 1]} : vector<4x96xf32> to vector<4x32xf32>
    %115 = arith.addf %113, %114 : vector<4x32xf32>
    %116 = arith.negf %115 : vector<4x32xf32>
    %117 = math.exp %116 : vector<4x32xf32>
    %cst_25 = arith.constant 1.000000e+00 : f32
    %118 = vector.broadcast %cst_25 : f32 to vector<4x32xf32>
    %119 = arith.addf %118, %117 : vector<4x32xf32>
    %120 = arith.divf %118, %119 : vector<4x32xf32>
    %121 = vector.extract_strided_slice %104 {offsets = [0, 64], sizes = [4, 32], strides = [1, 1]} : vector<4x96xf32> to vector<4x32xf32>
    %122 = vector.extract_strided_slice %103 {offsets = [0, 64], sizes = [4, 32], strides = [1, 1]} : vector<4x96xf32> to vector<4x32xf32>
    %123 = vector.broadcast %7 : vector<1x32xf32> to vector<4x32xf32>
    %124 = arith.addf %122, %123 : vector<4x32xf32>
    %125 = arith.mulf %112, %124 : vector<4x32xf32>
    %126 = arith.addf %121, %125 : vector<4x32xf32>
    %127 = math.tanh %126 : vector<4x32xf32>
    %cst_26 = arith.constant 1.000000e+00 : f32
    %128 = vector.broadcast %cst_26 : f32 to vector<4x32xf32>
    %129 = arith.subf %128, %120 : vector<4x32xf32>
    %130 = arith.mulf %129, %127 : vector<4x32xf32>
    %131 = arith.mulf %120, %101 : vector<4x32xf32>
    %132 = arith.addf %130, %131 : vector<4x32xf32>
    %133 = arith.truncf %132 : vector<4x32xf32> to vector<4x32xbf16>
    %cst_27 = arith.constant dense<0.000000e+00> : vector<4x96xf32>
    %134 = tpu.matmul %133, %6, %cst_27 {dimension_numbers = #tpu.dot_dimension_numbers<[1], [0], [0], [1], [0, 0, 1, 1], [], []>} : vector<4x32xbf16>, vector<32x96xbf16>, vector<4x96xf32> -> vector<4x96xf32>
    %135 = vector.extract_strided_slice %5 {offsets = [16, 0], sizes = [4, 96], strides = [1, 1]} : vector<32x96xf32> to vector<4x96xf32>
    %136 = vector.extract_strided_slice %135 {offsets = [0, 0], sizes = [4, 32], strides = [1, 1]} : vector<4x96xf32> to vector<4x32xf32>
    %137 = vector.extract_strided_slice %134 {offsets = [0, 0], sizes = [4, 32], strides = [1, 1]} : vector<4x96xf32> to vector<4x32xf32>
    %138 = arith.addf %136, %137 : vector<4x32xf32>
    %139 = arith.negf %138 : vector<4x32xf32>
    %140 = math.exp %139 : vector<4x32xf32>
    %cst_28 = arith.constant 1.000000e+00 : f32
    %141 = vector.broadcast %cst_28 : f32 to vector<4x32xf32>
    %142 = arith.addf %141, %140 : vector<4x32xf32>
    %143 = arith.divf %141, %142 : vector<4x32xf32>
    %144 = vector.extract_strided_slice %135 {offsets = [0, 32], sizes = [4, 32], strides = [1, 1]} : vector<4x96xf32> to vector<4x32xf32>
    %145 = vector.extract_strided_slice %134 {offsets = [0, 32], sizes = [4, 32], strides = [1, 1]} : vector<4x96xf32> to vector<4x32xf32>
    %146 = arith.addf %144, %145 : vector<4x32xf32>
    %147 = arith.negf %146 : vector<4x32xf32>
    %148 = math.exp %147 : vector<4x32xf32>
    %cst_29 = arith.constant 1.000000e+00 : f32
    %149 = vector.broadcast %cst_29 : f32 to vector<4x32xf32>
    %150 = arith.addf %149, %148 : vector<4x32xf32>
    %151 = arith.divf %149, %150 : vector<4x32xf32>
    %152 = vector.extract_strided_slice %135 {offsets = [0, 64], sizes = [4, 32], strides = [1, 1]} : vector<4x96xf32> to vector<4x32xf32>
    %153 = vector.extract_strided_slice %134 {offsets = [0, 64], sizes = [4, 32], strides = [1, 1]} : vector<4x96xf32> to vector<4x32xf32>
    %154 = vector.broadcast %7 : vector<1x32xf32> to vector<4x32xf32>
    %155 = arith.addf %153, %154 : vector<4x32xf32>
    %156 = arith.mulf %143, %155 : vector<4x32xf32>
    %157 = arith.addf %152, %156 : vector<4x32xf32>
    %158 = math.tanh %157 : vector<4x32xf32>
    %cst_30 = arith.constant 1.000000e+00 : f32
    %159 = vector.broadcast %cst_30 : f32 to vector<4x32xf32>
    %160 = arith.subf %159, %151 : vector<4x32xf32>
    %161 = arith.mulf %160, %158 : vector<4x32xf32>
    %162 = arith.mulf %151, %132 : vector<4x32xf32>
    %163 = arith.addf %161, %162 : vector<4x32xf32>
    %164 = arith.truncf %163 : vector<4x32xf32> to vector<4x32xbf16>
    %cst_31 = arith.constant dense<0.000000e+00> : vector<4x96xf32>
    %165 = tpu.matmul %164, %6, %cst_31 {dimension_numbers = #tpu.dot_dimension_numbers<[1], [0], [0], [1], [0, 0, 1, 1], [], []>} : vector<4x32xbf16>, vector<32x96xbf16>, vector<4x96xf32> -> vector<4x96xf32>
    %166 = vector.extract_strided_slice %5 {offsets = [20, 0], sizes = [4, 96], strides = [1, 1]} : vector<32x96xf32> to vector<4x96xf32>
    %167 = vector.extract_strided_slice %166 {offsets = [0, 0], sizes = [4, 32], strides = [1, 1]} : vector<4x96xf32> to vector<4x32xf32>
    %168 = vector.extract_strided_slice %165 {offsets = [0, 0], sizes = [4, 32], strides = [1, 1]} : vector<4x96xf32> to vector<4x32xf32>
    %169 = arith.addf %167, %168 : vector<4x32xf32>
    %170 = arith.negf %169 : vector<4x32xf32>
    %171 = math.exp %170 : vector<4x32xf32>
    %cst_32 = arith.constant 1.000000e+00 : f32
    %172 = vector.broadcast %cst_32 : f32 to vector<4x32xf32>
    %173 = arith.addf %172, %171 : vector<4x32xf32>
    %174 = arith.divf %172, %173 : vector<4x32xf32>
    %175 = vector.extract_strided_slice %166 {offsets = [0, 32], sizes = [4, 32], strides = [1, 1]} : vector<4x96xf32> to vector<4x32xf32>
    %176 = vector.extract_strided_slice %165 {offsets = [0, 32], sizes = [4, 32], strides = [1, 1]} : vector<4x96xf32> to vector<4x32xf32>
    %177 = arith.addf %175, %176 : vector<4x32xf32>
    %178 = arith.negf %177 : vector<4x32xf32>
    %179 = math.exp %178 : vector<4x32xf32>
    %cst_33 = arith.constant 1.000000e+00 : f32
    %180 = vector.broadcast %cst_33 : f32 to vector<4x32xf32>
    %181 = arith.addf %180, %179 : vector<4x32xf32>
    %182 = arith.divf %180, %181 : vector<4x32xf32>
    %183 = vector.extract_strided_slice %166 {offsets = [0, 64], sizes = [4, 32], strides = [1, 1]} : vector<4x96xf32> to vector<4x32xf32>
    %184 = vector.extract_strided_slice %165 {offsets = [0, 64], sizes = [4, 32], strides = [1, 1]} : vector<4x96xf32> to vector<4x32xf32>
    %185 = vector.broadcast %7 : vector<1x32xf32> to vector<4x32xf32>
    %186 = arith.addf %184, %185 : vector<4x32xf32>
    %187 = arith.mulf %174, %186 : vector<4x32xf32>
    %188 = arith.addf %183, %187 : vector<4x32xf32>
    %189 = math.tanh %188 : vector<4x32xf32>
    %cst_34 = arith.constant 1.000000e+00 : f32
    %190 = vector.broadcast %cst_34 : f32 to vector<4x32xf32>
    %191 = arith.subf %190, %182 : vector<4x32xf32>
    %192 = arith.mulf %191, %189 : vector<4x32xf32>
    %193 = arith.mulf %182, %163 : vector<4x32xf32>
    %194 = arith.addf %192, %193 : vector<4x32xf32>
    %195 = arith.truncf %194 : vector<4x32xf32> to vector<4x32xbf16>
    %cst_35 = arith.constant dense<0.000000e+00> : vector<4x96xf32>
    %196 = tpu.matmul %195, %6, %cst_35 {dimension_numbers = #tpu.dot_dimension_numbers<[1], [0], [0], [1], [0, 0, 1, 1], [], []>} : vector<4x32xbf16>, vector<32x96xbf16>, vector<4x96xf32> -> vector<4x96xf32>
    %197 = vector.extract_strided_slice %5 {offsets = [24, 0], sizes = [4, 96], strides = [1, 1]} : vector<32x96xf32> to vector<4x96xf32>
    %198 = vector.extract_strided_slice %197 {offsets = [0, 0], sizes = [4, 32], strides = [1, 1]} : vector<4x96xf32> to vector<4x32xf32>
    %199 = vector.extract_strided_slice %196 {offsets = [0, 0], sizes = [4, 32], strides = [1, 1]} : vector<4x96xf32> to vector<4x32xf32>
    %200 = arith.addf %198, %199 : vector<4x32xf32>
    %201 = arith.negf %200 : vector<4x32xf32>
    %202 = math.exp %201 : vector<4x32xf32>
    %cst_36 = arith.constant 1.000000e+00 : f32
    %203 = vector.broadcast %cst_36 : f32 to vector<4x32xf32>
    %204 = arith.addf %203, %202 : vector<4x32xf32>
    %205 = arith.divf %203, %204 : vector<4x32xf32>
    %206 = vector.extract_strided_slice %197 {offsets = [0, 32], sizes = [4, 32], strides = [1, 1]} : vector<4x96xf32> to vector<4x32xf32>
    %207 = vector.extract_strided_slice %196 {offsets = [0, 32], sizes = [4, 32], strides = [1, 1]} : vector<4x96xf32> to vector<4x32xf32>
    %208 = arith.addf %206, %207 : vector<4x32xf32>
    %209 = arith.negf %208 : vector<4x32xf32>
    %210 = math.exp %209 : vector<4x32xf32>
    %cst_37 = arith.constant 1.000000e+00 : f32
    %211 = vector.broadcast %cst_37 : f32 to vector<4x32xf32>
    %212 = arith.addf %211, %210 : vector<4x32xf32>
    %213 = arith.divf %211, %212 : vector<4x32xf32>
    %214 = vector.extract_strided_slice %197 {offsets = [0, 64], sizes = [4, 32], strides = [1, 1]} : vector<4x96xf32> to vector<4x32xf32>
    %215 = vector.extract_strided_slice %196 {offsets = [0, 64], sizes = [4, 32], strides = [1, 1]} : vector<4x96xf32> to vector<4x32xf32>
    %216 = vector.broadcast %7 : vector<1x32xf32> to vector<4x32xf32>
    %217 = arith.addf %215, %216 : vector<4x32xf32>
    %218 = arith.mulf %205, %217 : vector<4x32xf32>
    %219 = arith.addf %214, %218 : vector<4x32xf32>
    %220 = math.tanh %219 : vector<4x32xf32>
    %cst_38 = arith.constant 1.000000e+00 : f32
    %221 = vector.broadcast %cst_38 : f32 to vector<4x32xf32>
    %222 = arith.subf %221, %213 : vector<4x32xf32>
    %223 = arith.mulf %222, %220 : vector<4x32xf32>
    %224 = arith.mulf %213, %194 : vector<4x32xf32>
    %225 = arith.addf %223, %224 : vector<4x32xf32>
    %226 = arith.truncf %225 : vector<4x32xf32> to vector<4x32xbf16>
    %cst_39 = arith.constant dense<0.000000e+00> : vector<4x96xf32>
    %227 = tpu.matmul %226, %6, %cst_39 {dimension_numbers = #tpu.dot_dimension_numbers<[1], [0], [0], [1], [0, 0, 1, 1], [], []>} : vector<4x32xbf16>, vector<32x96xbf16>, vector<4x96xf32> -> vector<4x96xf32>
    %228 = vector.extract_strided_slice %5 {offsets = [28, 0], sizes = [4, 96], strides = [1, 1]} : vector<32x96xf32> to vector<4x96xf32>
    %229 = vector.extract_strided_slice %228 {offsets = [0, 0], sizes = [4, 32], strides = [1, 1]} : vector<4x96xf32> to vector<4x32xf32>
    %230 = vector.extract_strided_slice %227 {offsets = [0, 0], sizes = [4, 32], strides = [1, 1]} : vector<4x96xf32> to vector<4x32xf32>
    %231 = arith.addf %229, %230 : vector<4x32xf32>
    %232 = arith.negf %231 : vector<4x32xf32>
    %233 = math.exp %232 : vector<4x32xf32>
    %cst_40 = arith.constant 1.000000e+00 : f32
    %234 = vector.broadcast %cst_40 : f32 to vector<4x32xf32>
    %235 = arith.addf %234, %233 : vector<4x32xf32>
    %236 = arith.divf %234, %235 : vector<4x32xf32>
    %237 = vector.extract_strided_slice %228 {offsets = [0, 32], sizes = [4, 32], strides = [1, 1]} : vector<4x96xf32> to vector<4x32xf32>
    %238 = vector.extract_strided_slice %227 {offsets = [0, 32], sizes = [4, 32], strides = [1, 1]} : vector<4x96xf32> to vector<4x32xf32>
    %239 = arith.addf %237, %238 : vector<4x32xf32>
    %240 = arith.negf %239 : vector<4x32xf32>
    %241 = math.exp %240 : vector<4x32xf32>
    %cst_41 = arith.constant 1.000000e+00 : f32
    %242 = vector.broadcast %cst_41 : f32 to vector<4x32xf32>
    %243 = arith.addf %242, %241 : vector<4x32xf32>
    %244 = arith.divf %242, %243 : vector<4x32xf32>
    %245 = vector.extract_strided_slice %228 {offsets = [0, 64], sizes = [4, 32], strides = [1, 1]} : vector<4x96xf32> to vector<4x32xf32>
    %246 = vector.extract_strided_slice %227 {offsets = [0, 64], sizes = [4, 32], strides = [1, 1]} : vector<4x96xf32> to vector<4x32xf32>
    %247 = vector.broadcast %7 : vector<1x32xf32> to vector<4x32xf32>
    %248 = arith.addf %246, %247 : vector<4x32xf32>
    %249 = arith.mulf %236, %248 : vector<4x32xf32>
    %250 = arith.addf %245, %249 : vector<4x32xf32>
    %251 = math.tanh %250 : vector<4x32xf32>
    %cst_42 = arith.constant 1.000000e+00 : f32
    %252 = vector.broadcast %cst_42 : f32 to vector<4x32xf32>
    %253 = arith.subf %252, %244 : vector<4x32xf32>
    %254 = arith.mulf %253, %251 : vector<4x32xf32>
    %255 = arith.mulf %244, %225 : vector<4x32xf32>
    %256 = arith.addf %254, %255 : vector<4x32xf32>
    %c0_43 = arith.constant 0 : index
    %c0_44 = arith.constant 0 : index
    %257 = vector.load %arg9[%c0_43, %c0_44] : memref<4x32xf32, #tpu.memory_space<vmem>>, vector<4x32xf32>
    tpu.vector_store %arg9[%c0_43, %c0_44], %256 {strides = array<i32>} : memref<4x32xf32, #tpu.memory_space<vmem>>, vector<4x32xf32>,
    %258 = arith.truncf %256 : vector<4x32xf32> to vector<4x32xbf16>
    %c0_45 = arith.constant 0 : index
    %c0_46 = arith.constant 0 : index
    %259 = vector.load %arg6[%c0_45, %c0_46] : memref<32x32xbf16, #tpu.memory_space<vmem>>, vector<32x32xbf16>
    %cst_47 = arith.constant dense<0.000000e+00> : vector<4x32xf32>
    %260 = tpu.matmul %258, %259, %cst_47 {dimension_numbers = #tpu.dot_dimension_numbers<[1], [0], [0], [1], [0, 0, 1, 1], [], []>} : vector<4x32xbf16>, vector<32x32xbf16>, vector<4x32xf32> -> vector<4x32xf32>
    %c0_48 = arith.constant 0 : index
    %c0_49 = arith.constant 0 : index
    %261 = vector.load %arg7[%c0_48, %c0_49] : memref<1x32xf32, #tpu.memory_space<vmem>>, vector<1x32xf32>
    %262 = vector.broadcast %261 : vector<1x32xf32> to vector<4x32xf32>
    %263 = arith.addf %260, %262 : vector<4x32xf32>
    %c0_50 = arith.constant 0 : index
    %c0_51 = arith.constant 0 : index
    %264 = vector.load %arg8[%c0_50, %c0_51] : memref<4x32xf32, #tpu.memory_space<vmem>>, vector<4x32xf32>
    tpu.vector_store %arg8[%c0_50, %c0_51], %263 {strides = array<i32>} : memref<4x32xf32, #tpu.memory_space<vmem>>, vector<4x32xf32>,
    return
  }
}

</mosaic_0001>

<llo_original>
// kernel: tpu_custom_call.1
$region0: #{tpu_custom_call.1}
  #allocation0 [shape = 'u32[]', space=smem, size = 0x4, offset = 0x4, fixed_abs, tag = 'smem constant byte address 0x4 - core index']
  #allocation1 [shape = 'u32[144,128]{1,0:T(1,128)}', space=vmem, size = 0x12000, scoped, tag = 'internal scratch']
  %s0 = inlined_call_operand.vmem [shape: bf16[32,16], index: 0, kind: input, shape index: {}]
  %s1 = inlined_call_operand.hbm [shape: f32[4,32], index: 1, kind: input, shape index: {}]
  %s2 = inlined_call_operand.hbm [shape: bf16[16,96], index: 2, kind: input, shape index: {}]
  %s3 = inlined_call_operand.vmem [shape: bf16[32,96], index: 3, kind: input, shape index: {}]
  %s4 = inlined_call_operand.vmem [shape: f32[1,96], index: 4, kind: input, shape index: {}]
  %s5 = inlined_call_operand.vmem [shape: f32[1,32], index: 5, kind: input, shape index: {}]
  %s6 = inlined_call_operand.vmem [shape: bf16[32,32], index: 6, kind: input, shape index: {}]
  %s7 = inlined_call_operand.vmem [shape: f32[1,32], index: 7, kind: input, shape index: {}]
  %s8 = inlined_call_operand.hbm [shape: f32[4,32], index: 8, kind: output, shape index: {0}]
  %s9 = inlined_call_operand.hbm [shape: f32[4,32], index: 9, kind: output, shape index: {1}]
  %10 = xla_tuple %s8, %s9
  %s11 = sld [smem:[#allocation0]]
  $region58: #{tpu_custom_call.1} parent=0
    _
  %s13 = ssub.s32 1, %s11
  %s14 = scalar_select 0, %s13, %s11
  $region1: #{tpu_custom_call.1} parent=0
    #allocation2 [shape = 'u8[2048]{0}', space=vmem, size = 0x800, scoped, tag = 'input window, operand 1, single buffered']
    #allocation3 [shape = 's32[1]{0}', space=sflag, size = 0x4, scoped, tag = 'scoped memory for tpu_custom_call.1']
    #allocation4 [shape = 's32[1]{0}', space=sflag, size = 0x4, scoped, tag = 'scoped memory for tpu_custom_call.1']
    #allocation5 [shape = 'u8[4096]{0}', space=vmem, size = 0x1000, scoped, tag = 'input window, operand 2, single buffered']
    #allocation6 [shape = 's32[1]{0}', space=sflag, size = 0x4, scoped, tag = 'scoped memory for tpu_custom_call.1']
    #allocation7 [shape = 'u8[2048]{0}', space=vmem, size = 0x800, scoped, tag = 'output window, operand 0, single buffered']
    #allocation8 [shape = 'u8[2048]{0}', space=vmem, size = 0x800, scoped, tag = 'output window, operand 1, single buffered']
    #allocation9 [shape = 's32[1]{0}', space=sflag, size = 0x4, scoped, tag = 'scoped memory for tpu_custom_call.1']
    %15 = vsyncpa [#allocation3], 0
    %16 = vsyncpa [#allocation6], 0
    %17 = vsyncpa [#allocation4], 0
    %18 = vsyncpa [#allocation9], 0
    // Predicated region
    $region2: #{tpu_custom_call.1} parent=1 // pred_check
      _
    $region3: #{tpu_custom_call.1} parent=1 // pred_check_branch
      %20 = sbr.rel (0) target = $region5
    $region4: #{tpu_custom_call.1} parent=1 // pred_region
      _
    $region5: #{tpu_custom_call.1} parent=1 // pred_fallthru
      _
    // Predicated region
    $region6: #{tpu_custom_call.1} parent=1 // pred_check
      _
    $region7: #{tpu_custom_call.1} parent=1 // pred_check_branch
      %22 = sbr.rel (0) target = $region9
    $region8: #{tpu_custom_call.1} parent=1 // pred_region
      %s24 = ssub.s32 64, 64
      %25 = vsyncadd [#allocation3], %s24
      %s27 = sshll.u32 [#allocation2], 4
      %s28 = int_to_ptr.vmem [resolvable:$true] %s27
      %30 = dma.hbm_to_vmem [thread:$0]  %s1, 64, %s28, [#allocation3]
    $region9: #{tpu_custom_call.1} parent=1 // pred_fallthru
      _
    // Predicated region
    $region10: #{tpu_custom_call.1} parent=1 // pred_check
      _
    $region11: #{tpu_custom_call.1} parent=1 // pred_check_branch
      %32 = sbr.rel (0) target = $region13
    $region12: #{tpu_custom_call.1} parent=1 // pred_region
      %s34 = ssub.s32 128, 128
      %35 = vsyncadd [#allocation6], %s34
      %s36 = sshll.u32 [#allocation5], 4
      %s37 = int_to_ptr.vmem [resolvable:$true] %s36
      %42 = dma.hbm_to_vmem [thread:$0]  %s2, 128, %s37, [#allocation6], 64, 64, 4
    $region13: #{tpu_custom_call.1} parent=1 // pred_fallthru
      _
    // Predicated region
    $region14: #{tpu_custom_call.1} parent=1 // pred_check
      _
    $region15: #{tpu_custom_call.1} parent=1 // pred_check_branch
      %44 = sbr.rel (0) target = $region17
    $region16: #{tpu_custom_call.1} parent=1 // pred_region
      _
    $region17: #{tpu_custom_call.1} parent=1 // pred_fallthru
      _
    // Predicated region
    $region18: #{tpu_custom_call.1} parent=1 // pred_check
      _
    $region19: #{tpu_custom_call.1} parent=1 // pred_check_branch
      %46 = sbr.rel (0) target = $region21
    $region20: #{tpu_custom_call.1} parent=1 // pred_region
      _
    $region21: #{tpu_custom_call.1} parent=1 // pred_fallthru
      _
    // Predicated region
    $region22: #{tpu_custom_call.1} parent=1 // pred_check
      _
    $region23: #{tpu_custom_call.1} parent=1 // pred_check_branch
      %48 = sbr.rel (0) target = $region25
    $region24: #{tpu_custom_call.1} parent=1 // pred_region
      _
    $region25: #{tpu_custom_call.1} parent=1 // pred_fallthru
      _
    // Predicated region
    $region26: #{tpu_custom_call.1} parent=1 // pred_check
      _
    $region27: #{tpu_custom_call.1} parent=1 // pred_check_branch
      %50 = sbr.rel (0) target = $region29
    $region28: #{tpu_custom_call.1} parent=1 // pred_region
      _
    $region29: #{tpu_custom_call.1} parent=1 // pred_fallthru
      _
    // Predicated region
    $region30: #{tpu_custom_call.1} parent=1 // pred_check
      _
    $region31: #{tpu_custom_call.1} parent=1 // pred_check_branch
      %52 = sbr.rel (0) target = $region33
    $region32: #{tpu_custom_call.1} parent=1 // pred_region
      _
    $region33: #{tpu_custom_call.1} parent=1 // pred_fallthru
      _
    // Predicated region
    $region34: #{tpu_custom_call.1} parent=1 // pred_check
      _
    $region35: #{tpu_custom_call.1} parent=1 // pred_check_branch
      %54 = sbr.rel (0) target = $region37
    $region36: #{tpu_custom_call.1} parent=1 // pred_region
      %55 = dma.done [#allocation3], 64
    $region37: #{tpu_custom_call.1} parent=1 // pred_fallthru
      _
    // Predicated region
    $region38: #{tpu_custom_call.1} parent=1 // pred_check
      _
    $region39: #{tpu_custom_call.1} parent=1 // pred_check_branch
      %57 = sbr.rel (0) target = $region41
    $region40: #{tpu_custom_call.1} parent=1 // pred_region
      %58 = dma.done [#allocation6], 128
    $region41: #{tpu_custom_call.1} parent=1 // pred_fallthru
      _
    %v60 = vld [vmem:[%s0] sm:$0xf]
    %v61 = vld [vmem:[%s0 + $0x4] sm:$0xf]
    %v62 = vld [vmem:[%s0 + $0x8] sm:$0xf]
    %v63 = vld [vmem:[%s0 + $0xc] sm:$0xf]
    %v64 = vld [vmem:[#allocation5] sm:$0xf]
    %v65 = vld [vmem:[#allocation5 + $0x4] sm:$0xf]
    %v66 = vld [vmem:[%s4] sm:$0x1]
    %v68 = vlaneseq
    %v69 = vshrl.u32 %v68, 7
    %v70 = vsub.s32 0, %v69
    %v71 = vrot.slane %v66, %v70
    %v77 = vunpack.c.l.b16 %v60
    %v78 = vunpack.c.l.b16 %v61
    %v79 = vunpack.c.l.b16 %v62
    %v80 = vunpack.c.l.b16 %v63
    %v81 = vpack.c.b16 %v78, %v77
    %v82 = vpack.c.b16 %v80, %v79
    %v85 = vunpack.c.l.b16 %v64
    %v86 = vunpack.c.l.b16 %v65
    %v87 = vpack.c.b16 %v86, %v85
    %vm89 = vcmask 130048
    %v91 = vsel %vm89, %v81, 0
    %v94 = vsel %vm89, %v82, 0
    %96 = vmatprep.subr.bf16.mxu0 0
    %97 = vmatpush1.bf16.msra.mxu0 %v87
    %98 = vmatprep.subr.bf16.mxu0 0
    %99 = vmatpush1.bf16.msra.mxu0 0
    %100 = vmatprep.subr.bf16.mxu0 0
    %101 = vmatpush1.bf16.msra.mxu0 0
    %102 = vmatprep.subr.bf16.mxu0 0
    %103 = vmatpush1.bf16.msra.mxu0 0
    %104 = vmatprep.subr.bf16.mxu0 0
    %105 = vmatpush1.bf16.msra.mxu0 0
    %106 = vmatprep.subr.bf16.mxu0 0
    %107 = vmatpush1.bf16.msra.mxu0 0
    %108 = vmatprep.subr.bf16.mxu0 0
    %109 = vmatpush1.bf16.msra.mxu0 0
    %110 = vmatprep.subr.bf16.mxu0 0
    %111 = vmatpush1.bf16.msra.mxu0 0
    %112 = vmatprep.subr.bf16.mxu0 0
    %113 = vmatpush1.bf16.msra.mxu0 0
    %114 = vmatprep.subr.bf16.mxu0 0
    %115 = vmatpush1.bf16.msra.mxu0 0
    %116 = vmatprep.subr.bf16.mxu0 0
    %117 = vmatpush1.bf16.msra.mxu0 0
    %118 = vmatprep.subr.bf16.mxu0 0
    %119 = vmatpush1.bf16.msra.mxu0 0
    %120 = vmatprep.subr.bf16.mxu0 0
    %121 = vmatpush1.bf16.msra.mxu0 0
    %122 = vmatprep.subr.bf16.mxu0 0
    %123 = vmatpush1.bf16.msra.mxu0 0
    %124 = vmatprep.subr.bf16.mxu0 0
    %125 = vmatpush1.bf16.msra.mxu0 0
    %126 = vmatprep.subr.bf16.mxu0 0
    %127 = vmatpush1.bf16.msra.mxu0 0
    %128 = vmatprep.mubr.bf16.mxu0 0
    %129 = vmatmul.mubr.bf16.gmra.mrb[0].mxu0 %v91
    %v130 = vpop.f32.mrb[0].mxu0
    %v131 = vadd.f32 %v71, %v130
    %v132 = vpop.f32.mrb[0].mxu0
    %v133 = vpop.f32.mrb[0].mxu0
    %v134 = vadd.f32 %v71, %v133
    %v135 = vpop.f32.mrb[0].mxu0
    %136 = vmatprep.mubr.bf16.mxu0 0
    %137 = vmatmul.mubr.bf16.gmra.mrb[0].mxu0 %v94
    %v138 = vpop.f32.mrb[0].mxu0
    %v139 = vadd.f32 %v71, %v138
    %v140 = vpop.f32.mrb[0].mxu0
    %v141 = vpop.f32.mrb[0].mxu0
    %v142 = vadd.f32 %v71, %v141
    %v143 = vpop.f32.mrb[0].mxu0
    %144 = vdwg.mxu0
    %v145 = vld [vmem:[%s3] sm:$0xf]
    %v146 = vld [vmem:[%s3 + $0x4] sm:$0xf]
    %v147 = vld [vmem:[%s3 + $0x8] sm:$0xf]
    %v148 = vld [vmem:[%s3 + $0xc] sm:$0xf]
    %v149 = vld [vmem:[%s5] sm:$0x1]
    %v150 = vld [vmem:[#allocation2] sm:$0xf]
    %v151 = vpack.c.bf16 %v150, %v150
    %v156 = vunpack.c.l.b16 %v145
    %v157 = vunpack.c.l.b16 %v146
    %v158 = vunpack.c.l.b16 %v147
    %v159 = vunpack.c.l.b16 %v148
    %v160 = vpack.c.b16 %v157, %v156
    %v161 = vpack.c.b16 %v159, %v158
    %vm164 = vcmask 261120
    %v166 = vsel %vm164, %v151, 0
    %168 = vmatprep.subr.bf16.mxu0 0
    %169 = vmatpush1.bf16.msra.mxu0 %v160
    %170 = vmatprep.subr.bf16.mxu0 0
    %171 = vmatpush1.bf16.msra.mxu0 %v161
    %172 = vmatprep.subr.bf16.mxu0 0
    %173 = vmatpush1.bf16.msra.mxu0 0
    %174 = vmatprep.subr.bf16.mxu0 0
    %175 = vmatpush1.bf16.msra.mxu0 0
    %176 = vmatprep.subr.bf16.mxu0 0
    %177 = vmatpush1.bf16.msra.mxu0 0
    %178 = vmatprep.subr.bf16.mxu0 0
    %179 = vmatpush1.bf16.msra.mxu0 0
    %180 = vmatprep.subr.bf16.mxu0 0
    %181 = vmatpush1.bf16.msra.mxu0 0
    %182 = vmatprep.subr.bf16.mxu0 0
    %183 = vmatpush1.bf16.msra.mxu0 0
    %184 = vmatprep.subr.bf16.mxu0 0
    %185 = vmatpush1.bf16.msra.mxu0 0
    %186 = vmatprep.subr.bf16.mxu0 0
    %187 = vmatpush1.bf16.msra.mxu0 0
    %188 = vmatprep.subr.bf16.mxu0 0
    %189 = vmatpush1.bf16.msra.mxu0 0
    %190 = vmatprep.subr.bf16.mxu0 0
    %191 = vmatpush1.bf16.msra.mxu0 0
    %192 = vmatprep.subr.bf16.mxu0 0
    %193 = vmatpush1.bf16.msra.mxu0 0
    %194 = vmatprep.subr.bf16.mxu0 0
    %195 = vmatpush1.bf16.msra.mxu0 0
    %196 = vmatprep.subr.bf16.mxu0 0
    %197 = vmatpush1.bf16.msra.mxu0 0
    %198 = vmatprep.subr.bf16.mxu0 0
    %199 = vmatpush1.bf16.msra.mxu0 0
    %200 = vmatprep.mubr.bf16.mxu0 0
    %201 = vmatmul.mubr.bf16.gmra.mrb[0].mxu0 %v166
    %v202 = vpop.f32.mrb[0].mxu0
    %v203 = vadd.f32 0.0, %v202
    %v204 = vpop.f32.mrb[0].mxu0
    %v205 = vpop.f32.mrb[0].mxu0
    %v206 = vpop.f32.mrb[0].mxu0
    %207 = vdwg.mxu0
    %v208 = vadd.f32 %v131, %v203
    %v209 = vxor.u32 %v208, 2147483648
    %v210 = vmul.f32 %v209, 1.442695
    %v211 = vpow.pop %v210
    %v212 = vadd.f32 %v211, 1.0
    %v213 = vrcp.pop %v212
    %v214 = vmul.f32 1.0, %v213
    %v216 = vlaneseq
    %v217 = vshrl.u32 %v216, 7
    %v218 = vsub.s32 0, %v217
    %v219 = vrot.slane %v149, %v218
    %220 = vrot.lane.b32.xlu0 %v219, 64
    %v221 = vpop.permute.xlu0 %220
    %v223 = vadd.f32 %v203, %v221
    %225 = vrot.lane.b32.xlu0 %v223, 64
    %v226 = vpop.permute.xlu0 %225
    %v228 = vmul.f32 %v214, %v226
    %230 = vrot.lane.b32.xlu0 %v228, 64
    %v231 = vpop.permute.xlu0 %230
    %v233 = vadd.f32 %v131, %v231
    %v234 = vtanh.pop %v233
    %v235 = vsub.f32 1.0, %v214
    %237 = vrot.lane.b32.xlu0 %v234, 96
    %v238 = vpop.permute.xlu0 %237
    %v240 = vmul.f32 %v235, %v238
    %242 = vrot.lane.b32.xlu0 %v150, 32
    %v243 = vpop.permute.xlu0 %242
    %v245 = vmul.f32 %v214, %v243
    %v246 = vadd.f32 %v240, %v245
    %v247 = vpack.c.bf16 %v246, %v246
    %249 = vrot.lane.b32.xlu0 %v247, 96
    %v250 = vpop.permute.xlu0 %249
    %v252 = vsel %vm164, %v250, 0
    %254 = vmatprep.subr.bf16.mxu0 0
    %255 = vmatpush1.bf16.msra.mxu0 %v160
    %256 = vmatprep.subr.bf16.mxu0 0
    %257 = vmatpush1.bf16.msra.mxu0 %v161
    %258 = vmatprep.subr.bf16.mxu0 0
    %259 = vmatpush1.bf16.msra.mxu0 0
    %260 = vmatprep.subr.bf16.mxu0 0
    %261 = vmatpush1.bf16.msra.mxu0 0
    %262 = vmatprep.subr.bf16.mxu0 0
    %263 = vmatpush1.bf16.msra.mxu0 0
    %264 = vmatprep.subr.bf16.mxu0 0
    %265 = vmatpush1.bf16.msra.mxu0 0
    %266 = vmatprep.subr.bf16.mxu0 0
    %267 = vmatpush1.bf16.msra.mxu0 0
    %268 = vmatprep.subr.bf16.mxu0 0
    %269 = vmatpush1.bf16.msra.mxu0 0
    %270 = vmatprep.subr.bf16.mxu0 0
    %271 = vmatpush1.bf16.msra.mxu0 0
    %272 = vmatprep.subr.bf16.mxu0 0
    %273 = vmatpush1.bf16.msra.mxu0 0
    %274 = vmatprep.subr.bf16.mxu0 0
    %275 = vmatpush1.bf16.msra.mxu0 0
    %276 = vmatprep.subr.bf16.mxu0 0
    %277 = vmatpush1.bf16.msra.mxu0 0
    %278 = vmatprep.subr.bf16.mxu0 0
    %279 = vmatpush1.bf16.msra.mxu0 0
    %280 = vmatprep.subr.bf16.mxu0 0
    %281 = vmatpush1.bf16.msra.mxu0 0
    %282 = vmatprep.subr.bf16.mxu0 0
    %283 = vmatpush1.bf16.msra.mxu0 0
    %284 = vmatprep.subr.bf16.mxu0 0
    %285 = vmatpush1.bf16.msra.mxu0 0
    %286 = vmatprep.mubr.bf16.mxu0 0
    %287 = vmatmul.mubr.bf16.gmra.mrb[0].mxu0 %v252
    %v288 = vpop.f32.mrb[0].mxu0
    %v289 = vadd.f32 0.0, %v288
    %v290 = vpop.f32.mrb[0].mxu0
    %v291 = vpop.f32.mrb[0].mxu0
    %v292 = vpop.f32.mrb[0].mxu0
    %293 = vdwg.mxu0
    %v295 = vrot.slane %v289, 4
    %v297 = vadd.f32 %v131, %v295
    %v298 = vxor.u32 %v297, 2147483648
    %v299 = vmul.f32 %v298, 1.442695
    %v300 = vpow.pop %v299
    %v301 = vadd.f32 %v300, 1.0
    %v302 = vrcp.pop %v301
    %v303 = vmul.f32 1.0, %v302
    %v304 = vadd.f32 %v289, %v221
    %v306 = vrot.slane %v304, 4
    %307 = vrot.lane.b32.xlu0 %v306, 64
    %v308 = vpop.permute.xlu0 %307
    %v310 = vmul.f32 %v303, %v308
    %312 = vrot.lane.b32.xlu0 %v310, 64
    %v313 = vpop.permute.xlu0 %312
    %v315 = vadd.f32 %v131, %v313
    %v316 = vtanh.pop %v315
    %v317 = vsub.f32 1.0, %v303
    %319 = vrot.lane.b32.xlu0 %v316, 96
    %v320 = vpop.permute.xlu0 %319
    %v322 = vmul.f32 %v317, %v320
    %v324 = vrot.slane %v246, 4
    %v326 = vmul.f32 %v303, %v324
    %v327 = vadd.f32 %v322, %v326
    %v328 = vpack.c.bf16 %v327, %v327
    %v330 = vrot.slane %v328, 2
    %331 = vrot.lane.b32.xlu0 %v330, 96
    %v332 = vpop.permute.xlu0 %331
    %v334 = vsel %vm164, %v332, 0
    %336 = vmatprep.subr.bf16.mxu0 0
    %337 = vmatpush1.bf16.msra.mxu0 %v160
    %338 = vmatprep.subr.bf16.mxu0 0
    %339 = vmatpush1.bf16.msra.mxu0 %v161
    %340 = vmatprep.subr.bf16.mxu0 0
    %341 = vmatpush1.bf16.msra.mxu0 0
    %342 = vmatprep.subr.bf16.mxu0 0
    %343 = vmatpush1.bf16.msra.mxu0 0
    %344 = vmatprep.subr.bf16.mxu0 0
    %345 = vmatpush1.bf16.msra.mxu0 0
    %346 = vmatprep.subr.bf16.mxu0 0
    %347 = vmatpush1.bf16.msra.mxu0 0
    %348 = vmatprep.subr.bf16.mxu0 0
    %349 = vmatpush1.bf16.msra.mxu0 0
    %350 = vmatprep.subr.bf16.mxu0 0
    %351 = vmatpush1.bf16.msra.mxu0 0
    %352 = vmatprep.subr.bf16.mxu0 0
    %353 = vmatpush1.bf16.msra.mxu0 0
    %354 = vmatprep.subr.bf16.mxu0 0
    %355 = vmatpush1.bf16.msra.mxu0 0
    %356 = vmatprep.subr.bf16.mxu0 0
    %357 = vmatpush1.bf16.msra.mxu0 0
    %358 = vmatprep.subr.bf16.mxu0 0
    %359 = vmatpush1.bf16.msra.mxu0 0
    %360 = vmatprep.subr.bf16.mxu0 0
    %361 = vmatpush1.bf16.msra.mxu0 0
    %362 = vmatprep.subr.bf16.mxu0 0
    %363 = vmatpush1.bf16.msra.mxu0 0
    %364 = vmatprep.subr.bf16.mxu0 0
    %365 = vmatpush1.bf16.msra.mxu0 0
    %366 = vmatprep.subr.bf16.mxu0 0
    %367 = vmatpush1.bf16.msra.mxu0 0
    %368 = vmatprep.mubr.bf16.mxu0 0
    %369 = vmatmul.mubr.bf16.gmra.mrb[0].mxu0 %v334
    %v370 = vpop.f32.mrb[0].mxu0
    %v371 = vadd.f32 0.0, %v370
    %v372 = vpop.f32.mrb[0].mxu0
    %v373 = vpop.f32.mrb[0].mxu0
    %v374 = vpop.f32.mrb[0].mxu0
    %375 = vdwg.mxu0
    %v376 = vadd.f32 %v134, %v371
    %v377 = vxor.u32 %v376, 2147483648
    %v378 = vmul.f32 %v377, 1.442695
    %v379 = vpow.pop %v378
    %v380 = vadd.f32 %v379, 1.0
    %v381 = vrcp.pop %v380
    %v382 = vmul.f32 1.0, %v381
    %v383 = vadd.f32 %v371, %v221
    %385 = vrot.lane.b32.xlu0 %v383, 64
    %v386 = vpop.permute.xlu0 %385
    %v388 = vmul.f32 %v382, %v386
    %390 = vrot.lane.b32.xlu0 %v388, 64
    %v391 = vpop.permute.xlu0 %390
    %v393 = vadd.f32 %v134, %v391
    %v394 = vtanh.pop %v393
    %v395 = vsub.f32 1.0, %v382
    %397 = vrot.lane.b32.xlu0 %v394, 96
    %v398 = vpop.permute.xlu0 %397
    %v400 = vmul.f32 %v395, %v398
    %v402 = vrot.slane %v327, 4
    %v404 = vmul.f32 %v382, %v402
    %v405 = vadd.f32 %v400, %v404
    %v406 = vpack.c.bf16 %v405, %v405
    %408 = vrot.lane.b32.xlu0 %v406, 96
    %v409 = vpop.permute.xlu0 %408
    %v411 = vsel %vm164, %v409, 0
    %413 = vmatprep.subr.bf16.mxu0 0
    %414 = vmatpush1.bf16.msra.mxu0 %v160
    %415 = vmatprep.subr.bf16.mxu0 0
    %416 = vmatpush1.bf16.msra.mxu0 %v161
    %417 = vmatprep.subr.bf16.mxu0 0
    %418 = vmatpush1.bf16.msra.mxu0 0
    %419 = vmatprep.subr.bf16.mxu0 0
    %420 = vmatpush1.bf16.msra.mxu0 0
    %421 = vmatprep.subr.bf16.mxu0 0
    %422 = vmatpush1.bf16.msra.mxu0 0
    %423 = vmatprep.subr.bf16.mxu0 0
    %424 = vmatpush1.bf16.msra.mxu0 0
    %425 = vmatprep.subr.bf16.mxu0 0
    %426 = vmatpush1.bf16.msra.mxu0 0
    %427 = vmatprep.subr.bf16.mxu0 0
    %428 = vmatpush1.bf16.msra.mxu0 0
    %429 = vmatprep.subr.bf16.mxu0 0
    %430 = vmatpush1.bf16.msra.mxu0 0
    %431 = vmatprep.subr.bf16.mxu0 0
    %432 = vmatpush1.bf16.msra.mxu0 0
    %433 = vmatprep.subr.bf16.mxu0 0
    %434 = vmatpush1.bf16.msra.mxu0 0
    %435 = vmatprep.subr.bf16.mxu0 0
    %436 = vmatpush1.bf16.msra.mxu0 0
    %437 = vmatprep.subr.bf16.mxu0 0
    %438 = vmatpush1.bf16.msra.mxu0 0
    %439 = vmatprep.subr.bf16.mxu0 0
    %440 = vmatpush1.bf16.msra.mxu0 0
    %441 = vmatprep.subr.bf16.mxu0 0
    %442 = vmatpush1.bf16.msra.mxu0 0
    %443 = vmatprep.subr.bf16.mxu0 0
    %444 = vmatpush1.bf16.msra.mxu0 0
    %445 = vmatprep.mubr.bf16.mxu0 0
    %446 = vmatmul.mubr.bf16.gmra.mrb[0].mxu0 %v411
    %v447 = vpop.f32.mrb[0].mxu0
    %v448 = vadd.f32 0.0, %v447
    %v449 = vpop.f32.mrb[0].mxu0
    %v450 = vpop.f32.mrb[0].mxu0
    %v451 = vpop.f32.mrb[0].mxu0
    %452 = vdwg.mxu0
    %v454 = vrot.slane %v448, 4
    %v456 = vadd.f32 %v134, %v454
    %v457 = vxor.u32 %v456, 2147483648
    %v458 = vmul.f32 %v457, 1.442695
    %v459 = vpow.pop %v458
    %v460 = vadd.f32 %v459, 1.0
    %v461 = vrcp.pop %v460
    %v462 = vmul.f32 1.0, %v461
    %v463 = vadd.f32 %v448, %v221
    %v465 = vrot.slane %v463, 4
    %466 = vrot.lane.b32.xlu0 %v465, 64
    %v467 = vpop.permute.xlu0 %466
    %v469 = vmul.f32 %v462, %v467
    %471 = vrot.lane.b32.xlu0 %v469, 64
    %v472 = vpop.permute.xlu0 %471
    %v474 = vadd.f32 %v134, %v472
    %v475 = vtanh.pop %v474
    %v476 = vsub.f32 1.0, %v462
    %478 = vrot.lane.b32.xlu0 %v475, 96
    %v479 = vpop.permute.xlu0 %478
    %v481 = vmul.f32 %v476, %v479
    %v483 = vrot.slane %v405, 4
    %v485 = vmul.f32 %v462, %v483
    %v486 = vadd.f32 %v481, %v485
    %v487 = vpack.c.bf16 %v486, %v486
    %v489 = vrot.slane %v487, 2
    %490 = vrot.lane.b32.xlu0 %v489, 96
    %v491 = vpop.permute.xlu0 %490
    %v493 = vsel %vm164, %v491, 0
    %495 = vmatprep.subr.bf16.mxu0 0
    %496 = vmatpush1.bf16.msra.mxu0 %v160
    %497 = vmatprep.subr.bf16.mxu0 0
    %498 = vmatpush1.bf16.msra.mxu0 %v161
    %499 = vmatprep.subr.bf16.mxu0 0
    %500 = vmatpush1.bf16.msra.mxu0 0
    %501 = vmatprep.subr.bf16.mxu0 0
    %502 = vmatpush1.bf16.msra.mxu0 0
    %503 = vmatprep.subr.bf16.mxu0 0
    %504 = vmatpush1.bf16.msra.mxu0 0
    %505 = vmatprep.subr.bf16.mxu0 0
    %506 = vmatpush1.bf16.msra.mxu0 0
    %507 = vmatprep.subr.bf16.mxu0 0
    %508 = vmatpush1.bf16.msra.mxu0 0
    %509 = vmatprep.subr.bf16.mxu0 0
    %510 = vmatpush1.bf16.msra.mxu0 0
    %511 = vmatprep.subr.bf16.mxu0 0
    %512 = vmatpush1.bf16.msra.mxu0 0
    %513 = vmatprep.subr.bf16.mxu0 0
    %514 = vmatpush1.bf16.msra.mxu0 0
    %515 = vmatprep.subr.bf16.mxu0 0
    %516 = vmatpush1.bf16.msra.mxu0 0
    %517 = vmatprep.subr.bf16.mxu0 0
    %518 = vmatpush1.bf16.msra.mxu0 0
    %519 = vmatprep.subr.bf16.mxu0 0
    %520 = vmatpush1.bf16.msra.mxu0 0
    %521 = vmatprep.subr.bf16.mxu0 0
    %522 = vmatpush1.bf16.msra.mxu0 0
    %523 = vmatprep.subr.bf16.mxu0 0
    %524 = vmatpush1.bf16.msra.mxu0 0
    %525 = vmatprep.subr.bf16.mxu0 0
    %526 = vmatpush1.bf16.msra.mxu0 0
    %527 = vmatprep.mubr.bf16.mxu0 0
    %528 = vmatmul.mubr.bf16.gmra.mrb[0].mxu0 %v493
    %v529 = vpop.f32.mrb[0].mxu0
    %v530 = vadd.f32 0.0, %v529
    %v531 = vpop.f32.mrb[0].mxu0
    %v532 = vpop.f32.mrb[0].mxu0
    %v533 = vpop.f32.mrb[0].mxu0
    %534 = vdwg.mxu0
    %v535 = vadd.f32 %v139, %v530
    %v536 = vxor.u32 %v535, 2147483648
    %v537 = vmul.f32 %v536, 1.442695
    %v538 = vpow.pop %v537
    %v539 = vadd.f32 %v538, 1.0
    %v540 = vrcp.pop %v539
    %v541 = vmul.f32 1.0, %v540
    %v542 = vadd.f32 %v530, %v221
    %544 = vrot.lane.b32.xlu0 %v542, 64
    %v545 = vpop.permute.xlu0 %544
    %v547 = vmul.f32 %v541, %v545
    %549 = vrot.lane.b32.xlu0 %v547, 64
    %v550 = vpop.permute.xlu0 %549
    %v552 = vadd.f32 %v139, %v550
    %v553 = vtanh.pop %v552
    %v554 = vsub.f32 1.0, %v541
    %556 = vrot.lane.b32.xlu0 %v553, 96
    %v557 = vpop.permute.xlu0 %556
    %v559 = vmul.f32 %v554, %v557
    %v561 = vrot.slane %v486, 4
    %v563 = vmul.f32 %v541, %v561
    %v564 = vadd.f32 %v559, %v563
    %v565 = vpack.c.bf16 %v564, %v564
    %567 = vrot.lane.b32.xlu0 %v565, 96
    %v568 = vpop.permute.xlu0 %567
    %v570 = vsel %vm164, %v568, 0
    %572 = vmatprep.subr.bf16.mxu0 0
    %573 = vmatpush1.bf16.msra.mxu0 %v160
    %574 = vmatprep.subr.bf16.mxu0 0
    %575 = vmatpush1.bf16.msra.mxu0 %v161
    %576 = vmatprep.subr.bf16.mxu0 0
    %577 = vmatpush1.bf16.msra.mxu0 0
    %578 = vmatprep.subr.bf16.mxu0 0
    %579 = vmatpush1.bf16.msra.mxu0 0
    %580 = vmatprep.subr.bf16.mxu0 0
    %581 = vmatpush1.bf16.msra.mxu0 0
    %582 = vmatprep.subr.bf16.mxu0 0
    %583 = vmatpush1.bf16.msra.mxu0 0
    %584 = vmatprep.subr.bf16.mxu0 0
    %585 = vmatpush1.bf16.msra.mxu0 0
    %586 = vmatprep.subr.bf16.mxu0 0
    %587 = vmatpush1.bf16.msra.mxu0 0
    %588 = vmatprep.subr.bf16.mxu0 0
    %589 = vmatpush1.bf16.msra.mxu0 0
    %590 = vmatprep.subr.bf16.mxu0 0
    %591 = vmatpush1.bf16.msra.mxu0 0
    %592 = vmatprep.subr.bf16.mxu0 0
    %593 = vmatpush1.bf16.msra.mxu0 0
    %594 = vmatprep.subr.bf16.mxu0 0
    %595 = vmatpush1.bf16.msra.mxu0 0
    %596 = vmatprep.subr.bf16.mxu0 0
    %597 = vmatpush1.bf16.msra.mxu0 0
    %598 = vmatprep.subr.bf16.mxu0 0
    %599 = vmatpush1.bf16.msra.mxu0 0
    %600 = vmatprep.subr.bf16.mxu0 0
    %601 = vmatpush1.bf16.msra.mxu0 0
    %602 = vmatprep.subr.bf16.mxu0 0
    %603 = vmatpush1.bf16.msra.mxu0 0
    %604 = vmatprep.mubr.bf16.mxu0 0
    %605 = vmatmul.mubr.bf16.gmra.mrb[0].mxu0 %v570
    %v606 = vpop.f32.mrb[0].mxu0
    %v607 = vadd.f32 0.0, %v606
    %v608 = vpop.f32.mrb[0].mxu0
    %v609 = vpop.f32.mrb[0].mxu0
    %v610 = vpop.f32.mrb[0].mxu0
    %611 = vdwg.mxu0
    %v613 = vrot.slane %v607, 4
    %v615 = vadd.f32 %v139, %v613
    %v616 = vxor.u32 %v615, 2147483648
    %v617 = vmul.f32 %v616, 1.442695
    %v618 = vpow.pop %v617
    %v619 = vadd.f32 %v618, 1.0
    %v620 = vrcp.pop %v619
    %v621 = vmul.f32 1.0, %v620
    %v622 = vadd.f32 %v607, %v221
    %v624 = vrot.slane %v622, 4
    %625 = vrot.lane.b32.xlu0 %v624, 64
    %v626 = vpop.permute.xlu0 %625
    %v628 = vmul.f32 %v621, %v626
    %630 = vrot.lane.b32.xlu0 %v628, 64
    %v631 = vpop.permute.xlu0 %630
    %v633 = vadd.f32 %v139, %v631
    %v634 = vtanh.pop %v633
    %v635 = vsub.f32 1.0, %v621
    %637 = vrot.lane.b32.xlu0 %v634, 96
    %v638 = vpop.permute.xlu0 %637
    %v640 = vmul.f32 %v635, %v638
    %v642 = vrot.slane %v564, 4
    %v644 = vmul.f32 %v621, %v642
    %v645 = vadd.f32 %v640, %v644
    %v646 = vpack.c.bf16 %v645, %v645
    %v648 = vrot.slane %v646, 2
    %649 = vrot.lane.b32.xlu0 %v648, 96
    %v650 = vpop.permute.xlu0 %649
    %v652 = vsel %vm164, %v650, 0
    %654 = vmatprep.subr.bf16.mxu0 0
    %655 = vmatpush1.bf16.msra.mxu0 %v160
    %656 = vmatprep.subr.bf16.mxu0 0
    %657 = vmatpush1.bf16.msra.mxu0 %v161
    %658 = vmatprep.subr.bf16.mxu0 0
    %659 = vmatpush1.bf16.msra.mxu0 0
    %660 = vmatprep.subr.bf16.mxu0 0
    %661 = vmatpush1.bf16.msra.mxu0 0
    %662 = vmatprep.subr.bf16.mxu0 0
    %663 = vmatpush1.bf16.msra.mxu0 0
    %664 = vmatprep.subr.bf16.mxu0 0
    %665 = vmatpush1.bf16.msra.mxu0 0
    %666 = vmatprep.subr.bf16.mxu0 0
    %667 = vmatpush1.bf16.msra.mxu0 0
    %668 = vmatprep.subr.bf16.mxu0 0
    %669 = vmatpush1.bf16.msra.mxu0 0
    %670 = vmatprep.subr.bf16.mxu0 0
    %671 = vmatpush1.bf16.msra.mxu0 0
    %672 = vmatprep.subr.bf16.mxu0 0
    %673 = vmatpush1.bf16.msra.mxu0 0
    %674 = vmatprep.subr.bf16.mxu0 0
    %675 = vmatpush1.bf16.msra.mxu0 0
    %676 = vmatprep.subr.bf16.mxu0 0
    %677 = vmatpush1.bf16.msra.mxu0 0
    %678 = vmatprep.subr.bf16.mxu0 0
    %679 = vmatpush1.bf16.msra.mxu0 0
    %680 = vmatprep.subr.bf16.mxu0 0
    %681 = vmatpush1.bf16.msra.mxu0 0
    %682 = vmatprep.subr.bf16.mxu0 0
    %683 = vmatpush1.bf16.msra.mxu0 0
    %684 = vmatprep.subr.bf16.mxu0 0
    %685 = vmatpush1.bf16.msra.mxu0 0
    %686 = vmatprep.mubr.bf16.mxu0 0
    %687 = vmatmul.mubr.bf16.gmra.mrb[0].mxu0 %v652
    %v688 = vpop.f32.mrb[0].mxu0
    %v689 = vadd.f32 0.0, %v688
    %v690 = vpop.f32.mrb[0].mxu0
    %v691 = vpop.f32.mrb[0].mxu0
    %v692 = vpop.f32.mrb[0].mxu0
    %693 = vdwg.mxu0
    %v694 = vadd.f32 %v142, %v689
    %v695 = vxor.u32 %v694, 2147483648
    %v696 = vmul.f32 %v695, 1.442695
    %v697 = vpow.pop %v696
    %v698 = vadd.f32 %v697, 1.0
    %v699 = vrcp.pop %v698
    %v700 = vmul.f32 1.0, %v699
    %v701 = vadd.f32 %v689, %v221
    %703 = vrot.lane.b32.xlu0 %v701, 64
    %v704 = vpop.permute.xlu0 %703
    %v706 = vmul.f32 %v700, %v704
    %708 = vrot.lane.b32.xlu0 %v706, 64
    %v709 = vpop.permute.xlu0 %708
    %v711 = vadd.f32 %v142, %v709
    %v712 = vtanh.pop %v711
    %v713 = vsub.f32 1.0, %v700
    %715 = vrot.lane.b32.xlu0 %v712, 96
    %v716 = vpop.permute.xlu0 %715
    %v718 = vmul.f32 %v713, %v716
    %v720 = vrot.slane %v645, 4
    %v722 = vmul.f32 %v700, %v720
    %v723 = vadd.f32 %v718, %v722
    %v724 = vpack.c.bf16 %v723, %v723
    %726 = vrot.lane.b32.xlu0 %v724, 96
    %v727 = vpop.permute.xlu0 %726
    %v729 = vsel %vm164, %v727, 0
    %731 = vmatprep.subr.bf16.mxu0 0
    %732 = vmatpush1.bf16.msra.mxu0 %v160
    %733 = vmatprep.subr.bf16.mxu0 0
    %734 = vmatpush1.bf16.msra.mxu0 %v161
    %735 = vmatprep.subr.bf16.mxu0 0
    %736 = vmatpush1.bf16.msra.mxu0 0
    %737 = vmatprep.subr.bf16.mxu0 0
    %738 = vmatpush1.bf16.msra.mxu0 0
    %739 = vmatprep.subr.bf16.mxu0 0
    %740 = vmatpush1.bf16.msra.mxu0 0
    %741 = vmatprep.subr.bf16.mxu0 0
    %742 = vmatpush1.bf16.msra.mxu0 0
    %743 = vmatprep.subr.bf16.mxu0 0
    %744 = vmatpush1.bf16.msra.mxu0 0
    %745 = vmatprep.subr.bf16.mxu0 0
    %746 = vmatpush1.bf16.msra.mxu0 0
    %747 = vmatprep.subr.bf16.mxu0 0
    %748 = vmatpush1.bf16.msra.mxu0 0
    %749 = vmatprep.subr.bf16.mxu0 0
    %750 = vmatpush1.bf16.msra.mxu0 0
    %751 = vmatprep.subr.bf16.mxu0 0
    %752 = vmatpush1.bf16.msra.mxu0 0
    %753 = vmatprep.subr.bf16.mxu0 0
    %754 = vmatpush1.bf16.msra.mxu0 0
    %755 = vmatprep.subr.bf16.mxu0 0
    %756 = vmatpush1.bf16.msra.mxu0 0
    %757 = vmatprep.subr.bf16.mxu0 0
    %758 = vmatpush1.bf16.msra.mxu0 0
    %759 = vmatprep.subr.bf16.mxu0 0
    %760 = vmatpush1.bf16.msra.mxu0 0
    %761 = vmatprep.subr.bf16.mxu0 0
    %762 = vmatpush1.bf16.msra.mxu0 0
    %763 = vmatprep.mubr.bf16.mxu0 0
    %764 = vmatmul.mubr.bf16.gmra.mrb[0].mxu0 %v729
    %v765 = vpop.f32.mrb[0].mxu0
    %v766 = vadd.f32 0.0, %v765
    %v767 = vpop.f32.mrb[0].mxu0
    %v768 = vpop.f32.mrb[0].mxu0
    %v769 = vpop.f32.mrb[0].mxu0
    %770 = vdwg.mxu0
    %v772 = vrot.slane %v766, 4
    %v774 = vadd.f32 %v142, %v772
    %v775 = vxor.u32 %v774, 2147483648
    %v776 = vmul.f32 %v775, 1.442695
    %v777 = vpow.pop %v776
    %v778 = vadd.f32 %v777, 1.0
    %v779 = vrcp.pop %v778
    %v780 = vmul.f32 1.0, %v779
    %v781 = vadd.f32 %v766, %v221
    %v783 = vrot.slane %v781, 4
    %784 = vrot.lane.b32.xlu0 %v783, 64
    %v785 = vpop.permute.xlu0 %784
    %v787 = vmul.f32 %v780, %v785
    %789 = vrot.lane.b32.xlu0 %v787, 64
    %v790 = vpop.permute.xlu0 %789
    %v792 = vadd.f32 %v142, %v790
    %v793 = vtanh.pop %v792
    %v794 = vsub.f32 1.0, %v780
    %796 = vrot.lane.b32.xlu0 %v793, 96
    %v797 = vpop.permute.xlu0 %796
    %v799 = vmul.f32 %v794, %v797
    %v801 = vrot.slane %v723, 4
    %v803 = vmul.f32 %v780, %v801
    %v804 = vadd.f32 %v799, %v803
    %806 = vrot.lane.b32.xlu0 %v804, 96
    %v807 = vpop.permute.xlu0 %806
    %vm809 = vcmask 261124
    %810 = vst.msk [vmem:[#allocation8 - $0x4] sm:$0xf0] %vm809, %v807
    %v811 = vpack.c.bf16 %v804, %v804
    %v812 = vld [vmem:[%s6] sm:$0xf]
    %v813 = vld [vmem:[%s6 + $0x4] sm:$0xf]
    %v814 = vld [vmem:[%s6 + $0x8] sm:$0xf]
    %v815 = vld [vmem:[%s6 + $0xc] sm:$0xf]
    %v816 = vld [vmem:[%s7] sm:$0x1]
    %v818 = vlaneseq
    %v819 = vshrl.u32 %v818, 7
    %v820 = vsub.s32 0, %v819
    %v821 = vrot.slane %v816, %v820
    %v824 = vrot.slane %v811, 2
    %825 = vrot.lane.b32.xlu0 %v824, 96
    %v826 = vpop.permute.xlu0 %825
    %v831 = vunpack.c.l.b16 %v812
    %v832 = vunpack.c.l.b16 %v813
    %v833 = vunpack.c.l.b16 %v814
    %v834 = vunpack.c.l.b16 %v815
    %v835 = vpack.c.b16 %v832, %v831
    %v836 = vpack.c.b16 %v834, %v833
    %v840 = vsel %vm164, %v826, 0
    %842 = vmatprep.subr.bf16.mxu0 0
    %843 = vmatpush1.bf16.msra.mxu0 %v835
    %844 = vmatprep.subr.bf16.mxu0 0
    %845 = vmatpush1.bf16.msra.mxu0 %v836
    %846 = vmatprep.subr.bf16.mxu0 0
    %847 = vmatpush1.bf16.msra.mxu0 0
    %848 = vmatprep.subr.bf16.mxu0 0
    %849 = vmatpush1.bf16.msra.mxu0 0
    %850 = vmatprep.subr.bf16.mxu0 0
    %851 = vmatpush1.bf16.msra.mxu0 0
    %852 = vmatprep.subr.bf16.mxu0 0
    %853 = vmatpush1.bf16.msra.mxu0 0
    %854 = vmatprep.subr.bf16.mxu0 0
    %855 = vmatpush1.bf16.msra.mxu0 0
    %856 = vmatprep.subr.bf16.mxu0 0
    %857 = vmatpush1.bf16.msra.mxu0 0
    %858 = vmatprep.subr.bf16.mxu0 0
    %859 = vmatpush1.bf16.msra.mxu0 0
    %860 = vmatprep.subr.bf16.mxu0 0
    %861 = vmatpush1.bf16.msra.mxu0 0
    %862 = vmatprep.subr.bf16.mxu0 0
    %863 = vmatpush1.bf16.msra.mxu0 0
    %864 = vmatprep.subr.bf16.mxu0 0
    %865 = vmatpush1.bf16.msra.mxu0 0
    %866 = vmatprep.subr.bf16.mxu0 0
    %867 = vmatpush1.bf16.msra.mxu0 0
    %868 = vmatprep.subr.bf16.mxu0 0
    %869 = vmatpush1.bf16.msra.mxu0 0
    %870 = vmatprep.subr.bf16.mxu0 0
    %871 = vmatpush1.bf16.msra.mxu0 0
    %872 = vmatprep.subr.bf16.mxu0 0
    %873 = vmatpush1.bf16.msra.mxu0 0
    %874 = vmatprep.mubr.bf16.mxu0 0
    %875 = vmatmul.mubr.bf16.gmra.mrb[0].mxu0 %v840
    %v876 = vpop.f32.mrb[0].mxu0
    %v877 = vadd.f32 %v821, %v876
    %v878 = vpop.f32.mrb[0].mxu0
    %v879 = vpop.f32.mrb[0].mxu0
    %v880 = vpop.f32.mrb[0].mxu0
    %881 = vdwg.mxu0
    %vm882 = vcmask 257024
    %883 = vst.msk [vmem:[#allocation7] sm:$0xf] %vm882, %v877
    // Predicated region
    $region42: #{tpu_custom_call.1} parent=1 // pred_check
      _
    $region43: #{tpu_custom_call.1} parent=1 // pred_check_branch
      %885 = sbr.rel (0) target = $region45
    $region44: #{tpu_custom_call.1} parent=1 // pred_region
      %s887 = ssub.s32 64, 64
      %888 = vsyncadd [#allocation4], %s887
      %s890 = sshll.u32 [#allocation7], 4
      %s891 = int_to_ptr.vmem [resolvable:$true] %s890
      %893 = dma.vmem_to_hbm [thread:$0]  %s891, 64, %s8, [#allocation4]
    $region45: #{tpu_custom_call.1} parent=1 // pred_fallthru
      _
    // Predicated region
    $region46: #{tpu_custom_call.1} parent=1 // pred_check
      _
    $region47: #{tpu_custom_call.1} parent=1 // pred_check_branch
      %895 = sbr.rel (0) target = $region49
    $region48: #{tpu_custom_call.1} parent=1 // pred_region
      %s897 = ssub.s32 64, 64
      %898 = vsyncadd [#allocation9], %s897
      %s900 = sshll.u32 [#allocation8], 4
      %s901 = int_to_ptr.vmem [resolvable:$true] %s900
      %903 = dma.vmem_to_hbm [thread:$0]  %s901, 64, %s9, [#allocation9]
    $region49: #{tpu_custom_call.1} parent=1 // pred_fallthru
      _
    // Predicated region
    $region50: #{tpu_custom_call.1} parent=1 // pred_check
      _
    $region51: #{tpu_custom_call.1} parent=1 // pred_check_branch
      %905 = sbr.rel (0) target = $region53
    $region52: #{tpu_custom_call.1} parent=1 // pred_region
      %906 = dma.done [#allocation4], 64
    $region53: #{tpu_custom_call.1} parent=1 // pred_fallthru
      _
    // Predicated region
    $region54: #{tpu_custom_call.1} parent=1 // pred_check
      _
    $region55: #{tpu_custom_call.1} parent=1 // pred_check_branch
      %908 = sbr.rel (0) target = $region57
    $region56: #{tpu_custom_call.1} parent=1 // pred_region
      %909 = dma.done [#allocation9], 64
    $region57: #{tpu_custom_call.1} parent=1 // pred_fallthru
      _
    %910 = vsyncpa [#allocation3], 1
    %911 = vsyncpa [#allocation6], 1
    %912 = vsyncpa [#allocation4], 1
    %913 = vsyncpa [#allocation9], 1

</llo_original>
